<compile_context>
chip_gen: v6e
topology: v6e:2x2x1
jax: 0.10.0
libtpu: 0.0.40
codegen_flags: <defaults>
</compile_context>

<pallas_src>
import functools

import jax
import jax.numpy as jnp
from jax import lax
from jax.experimental import pallas as pl
from jax.experimental.pallas import tpu as pltpu

_LANES = 128
_SUBLANES = 8
_MAX_BLOCK_ROWS = 4096   # (4096, 128) f32 = 2 MiB per input tile


def _num_splits():
    """2 on multi-TensorCore chips (v7x); 1 on single-TC chips (v5e/v6e)."""
    try:
        kind = jax.devices()[0].device_kind.lower()
    except Exception:
        return 1
    return 2 if "v7" in kind else 1


def _mse_partial_kernel(target_ref, output_ref, out_ref, acc_ref, *,
                        block_rows, acc_rows, blocks_per_split, total_rows,
                        sub_in_native):
    """Per-core partial sum((output - target)^2) -> lane-dense out_ref row."""
    core = pl.program_id(0)
    step = pl.program_id(1)

    @pl.when(step == 0)
    def _init():
        acc_ref[...] = jnp.zeros_like(acc_ref)

    virtual_block = core * blocks_per_split + step
    row_start = virtual_block * block_rows
    # Does this (possibly index-clamped) block run past the real rows?
    is_edge = row_start + block_rows > total_rows

    def diff():
        t = target_ref[...]
        o = output_ref[...]
        if sub_in_native:
            # Subtract in the native (floating) dtype, square/accumulate in f32.
            return (o - t).astype(jnp.float32)
        return o.astype(jnp.float32) - t.astype(jnp.float32)

    def accumulate(d):
        d2 = d * d
        acc_ref[...] += jnp.sum(
            d2.reshape(block_rows // acc_rows, acc_rows, _LANES), axis=0)

    @pl.when(jnp.logical_not(is_edge))
    def _interior():            # common path: no mask work at all
        accumulate(diff())

    @pl.when(is_edge)
    def _edge():
        # Mask BEFORE squaring so NaN/Inf garbage in the out-of-range rows of a
        # partial / clamped block can never poison the sum.
        row_ids = row_start + lax.broadcasted_iota(
            jnp.int32, (block_rows, _LANES), 0)
        accumulate(jnp.where(row_ids < total_rows, diff(), 0.0))

    @pl.when(step == pl.num_programs(1) - 1)
    def _finalize():
        out_ref[...] = jnp.sum(acc_ref[...], axis=0, keepdims=True)


def mse_loss(target, output):
    """Mean squared error over all elements (Pallas TPU reduction kernel).

    Note: accumulation is always float32 (slightly more accurate than PyTorch's
    native-dtype reduction for bf16/fp16 inputs).
    """
    assert target.shape == output.shape, "target/output shapes must match"
    n_elems = target.size
    if n_elems == 0:
        return jnp.float32(jnp.nan)   # matches F.mse_loss on empty inputs

    t_flat = jnp.ravel(target)
    o_flat = jnp.ravel(output)

    # Sublane granule for the native dtype (8 rows x 128 for f32, 16 for bf16,
    # 32 for int8/fp8) so the kernel slab needs no padding and no masked loads.
    itemsize = jnp.dtype(target.dtype).itemsize
    sublane_mult = _SUBLANES * max(1, 4 // itemsize)
    granule = sublane_mult * _LANES

    tail_elems = n_elems % granule
    main_elems = n_elems - tail_elems

    total = jnp.float32(0.0)
    if tail_elems:
        # Tiny (< granule elements) tail: handled directly, no full-array pad.
        dt = (o_flat[main_elems:].astype(jnp.float32)
              - t_flat[main_elems:].astype(jnp.float32))
        total = total + jnp.sum(dt * dt)

    if main_elems:
        rows = main_elems // _LANES                    # multiple of sublane_mult
        t2d = (t_flat[:main_elems] if tail_elems else t_flat).reshape(rows, _LANES)
        o2d = (o_flat[:main_elems] if tail_elems else o_flat).reshape(rows, _LANES)

        block_rows = min(_MAX_BLOCK_ROWS, rows)        # multiple of sublane_mult
        acc_rows = 32 if block_rows % 32 == 0 else _SUBLANES
        n_blocks = pl.cdiv(rows, block_rows)
        splits = _num_splits()
        blocks_per_split = pl.cdiv(n_blocks, splits)
        last_block = n_blocks - 1

        def in_map(c, j):
            # Clamp so an out-of-range virtual block of the 2-way core split
            # re-reads a valid block; the in-kernel edge mask zeroes it.
            return (jnp.minimum(c * blocks_per_split + j, last_block), 0)

        sub_in_native = bool(jnp.issubdtype(target.dtype, jnp.floating)
                             and target.dtype == output.dtype)

        kernel = functools.partial(
            _mse_partial_kernel,
            block_rows=block_rows, acc_rows=acc_rows,
            blocks_per_split=blocks_per_split, total_rows=rows,
            sub_in_native=sub_in_native)

        spec_kwargs = {}
        if splits > 1:
            # v7x: per-step DMAs are short -> 3-deep buffering smooths bubbles.
            spec_kwargs["pipeline_mode"] = pl.Buffered(3)
        in_spec = pl.BlockSpec((block_rows, _LANES), in_map, **spec_kwargs)

        partials = pl.pallas_call(
            kernel,
            out_shape=jax.ShapeDtypeStruct((splits, _LANES), jnp.float32),
            grid_spec=pltpu.PrefetchScalarGridSpec(
                num_scalar_prefetch=0,
                grid=(splits, blocks_per_split),
                in_specs=[in_spec, in_spec],
                out_specs=pl.BlockSpec((1, _LANES), lambda c, j: (c, 0)),
                scratch_shapes=[pltpu.VMEM((acc_rows, _LANES), jnp.float32)],
            ),
            compiler_params=pltpu.CompilerParams(
                dimension_semantics=("parallel", "arbitrary")),
        )(t2d, o2d)
        total = total + jnp.sum(partials)

    # Divide by the TRUE element count once, at the very end (reduction='mean').
    return total * jnp.float32(1.0 / n_elems)


if __name__ == "__main__":
    key = jax.random.PRNGKey(0)

    def _check(shape, k, rtol=1e-4, atol=1e-6):
        k1, k2 = jax.random.split(k)
        target = jax.random.normal(k1, shape, dtype=jnp.float32)
        output = jax.random.normal(k2, shape, dtype=jnp.float32)
        loss = mse_loss(target, output)
        jax.block_until_ready(loss)
        ref = jnp.mean((output - target) ** 2)
        assert jnp.allclose(loss, ref, rtol=rtol, atol=atol), (
            shape, float(loss), float(ref))

    k0, k1, k2, _ = jax.random.split(key, 4)
    # Primary: NCHW autoencoder reconstruction loss at a small shape.
    _check((2, 4, 16, 16), k0)      # 2048 elems -> single-block kernel path
    # Ragged element count: aligned slab through the kernel + tiny jnp tail.
    _check((3, 5, 37, 41), k1)      # 22755 elems = 176 rows + 227-elem tail
    # Multi-block with a partial final block (exercises the pl.when edge mask
    # and, on v7x, the 2-way core split with a clamped virtual block).
    _check((4, 4, 256, 257), k2)    # 1,052,672 elems -> 8224 rows -> 3 blocks
    print("KERNEL_OK")
</pallas_src>

<mosaic_0001>
module attributes {stable_mosaic.version = 11 : i64} {
  func.func @_mse_partial_kernel(%arg0: i32, %arg1: i32, %arg2: memref<16x128xf32, #tpu.memory_space<vmem>>, %arg3: memref<16x128xf32, #tpu.memory_space<vmem>>, %arg4: memref<1x128xf32, #tpu.memory_space<vmem>>, %arg5: memref<8x128xf32, #tpu.memory_space<vmem>>) attributes {dimension_semantics = [#tpu.dimension_semantics<parallel>, #tpu.dimension_semantics<arbitrary>], iteration_bounds = array<i64: 1, 1>, scalar_prefetch = 0 : i64, scratch_operands = 1 : i64, tpu.core_type = #tpu.core_type<tc>, window_params = [{transform_indices = @transform_0, window_bounds = array<i64: 16, 128>}, {transform_indices = @transform_1, window_bounds = array<i64: 16, 128>}, {transform_indices = @transform_2, window_bounds = array<i64: 1, 128>}]} {
    %c0_i32 = arith.constant 0 : i32
    %0 = arith.cmpi eq, %arg1, %c0_i32 : i32
    %1 = arith.extui %0 : i1 to i32
    %c0_i32_0 = arith.constant 0 : i32
    %2 = arith.cmpi ne, %1, %c0_i32_0 : i32
    scf.if %2 {
      %cst = arith.constant 0.000000e+00 : f32
      %16 = vector.broadcast %cst : f32 to vector<8x128xf32>
      %c0 = arith.constant 0 : index
      %c0_7 = arith.constant 0 : index
      %17 = vector.load %arg5[%c0, %c0_7] : memref<8x128xf32, #tpu.memory_space<vmem>>, vector<8x128xf32>
      tpu.vector_store %arg5[%c0, %c0_7], %16 {strides = array<i32>} : memref<8x128xf32, #tpu.memory_space<vmem>>, vector<8x128xf32>,
    } else {
    }
    %c1_i32 = arith.constant 1 : i32
    %3 = arith.muli %arg0, %c1_i32 : i32
    %4 = arith.addi %3, %arg1 : i32
    %c16_i32 = arith.constant 16 : i32
    %5 = arith.muli %4, %c16_i32 : i32
    %c16_i32_1 = arith.constant 16 : i32
    %6 = arith.addi %5, %c16_i32_1 : i32
    %c16_i32_2 = arith.constant 16 : i32
    %7 = arith.cmpi sgt, %6, %c16_i32_2 : i32
    %true = arith.constant true
    %8 = arith.xori %7, %true : i1
    %9 = arith.extui %8 : i1 to i32
    %c0_i32_3 = arith.constant 0 : i32
    %10 = arith.cmpi ne, %9, %c0_i32_3 : i32
    scf.if %10 {
      %c0 = arith.constant 0 : index
      %c0_7 = arith.constant 0 : index
      %16 = vector.load %arg2[%c0, %c0_7] : memref<16x128xf32, #tpu.memory_space<vmem>>, vector<16x128xf32>
      %c0_8 = arith.constant 0 : index
      %c0_9 = arith.constant 0 : index
      %17 = vector.load %arg3[%c0_8, %c0_9] : memref<16x128xf32, #tpu.memory_space<vmem>>, vector<16x128xf32>
      %18 = arith.subf %17, %16 : vector<16x128xf32>
      %19 = arith.mulf %18, %18 : vector<16x128xf32>
      %c0_10 = arith.constant 0 : index
      %c0_11 = arith.constant 0 : index
      %20 = vector.load %arg5[%c0_10, %c0_11] : memref<8x128xf32, #tpu.memory_space<vmem>>, vector<8x128xf32>
      %21 = vector.shape_cast %19 : vector<16x128xf32> to vector<2x8x128xf32>
      %cst = arith.constant dense<0.000000e+00> : vector<8x128xf32>
      %22 = vector.multi_reduction <add>, %21, %cst [0] : vector<2x8x128xf32> to vector<8x128xf32>
      %23 = arith.addf %20, %22 : vector<8x128xf32>
      %c0_12 = arith.constant 0 : index
      %c0_13 = arith.constant 0 : index
      %24 = vector.load %arg5[%c0_12, %c0_13] : memref<8x128xf32, #tpu.memory_space<vmem>>, vector<8x128xf32>
      tpu.vector_store %arg5[%c0_12, %c0_13], %23 {strides = array<i32>} : memref<8x128xf32, #tpu.memory_space<vmem>>, vector<8x128xf32>,
    } else {
    }
    %11 = arith.extui %7 : i1 to i32
    %c0_i32_4 = arith.constant 0 : i32
    %12 = arith.cmpi ne, %11, %c0_i32_4 : i32
    scf.if %12 {
      %16 = tpu.iota {dimensions = array<i32: 0>} : vector<16x128xi32>
      %17 = vector.broadcast %5 : i32 to vector<16x128xi32>
      %18 = arith.addi %17, %16 : vector<16x128xi32>
      %c16_i32_7 = arith.constant 16 : i32
      %19 = vector.broadcast %c16_i32_7 : i32 to vector<16x128xi32>
      %20 = arith.cmpi slt, %18, %19 : vector<16x128xi32>
      %c0 = arith.constant 0 : index
      %c0_8 = arith.constant 0 : index
      %21 = vector.load %arg2[%c0, %c0_8] : memref<16x128xf32, #tpu.memory_space<vmem>>, vector<16x128xf32>
      %c0_9 = arith.constant 0 : index
      %c0_10 = arith.constant 0 : index
      %22 = vector.load %arg3[%c0_9, %c0_10] : memref<16x128xf32, #tpu.memory_space<vmem>>, vector<16x128xf32>
      %23 = arith.subf %22, %21 : vector<16x128xf32>
      %cst = arith.constant 0.000000e+00 : f32
      %24 = vector.broadcast %cst : f32 to vector<16x128xf32>
      %25 = arith.select %20, %23, %24 : vector<16x128xi1>, vector<16x128xf32>
      %26 = arith.mulf %25, %25 : vector<16x128xf32>
      %c0_11 = arith.constant 0 : index
      %c0_12 = arith.constant 0 : index
      %27 = vector.load %arg5[%c0_11, %c0_12] : memref<8x128xf32, #tpu.memory_space<vmem>>, vector<8x128xf32>
      %28 = vector.shape_cast %26 : vector<16x128xf32> to vector<2x8x128xf32>
      %cst_13 = arith.constant dense<0.000000e+00> : vector<8x128xf32>
      %29 = vector.multi_reduction <add>, %28, %cst_13 [0] : vector<2x8x128xf32> to vector<8x128xf32>
      %30 = arith.addf %27, %29 : vector<8x128xf32>
      %c0_14 = arith.constant 0 : index
      %c0_15 = arith.constant 0 : index
      %31 = vector.load %arg5[%c0_14, %c0_15] : memref<8x128xf32, #tpu.memory_space<vmem>>, vector<8x128xf32>
      tpu.vector_store %arg5[%c0_14, %c0_15], %30 {strides = array<i32>} : memref<8x128xf32, #tpu.memory_space<vmem>>, vector<8x128xf32>,
    } else {
    }
    %c0_i32_5 = arith.constant 0 : i32
    %13 = arith.cmpi eq, %arg1, %c0_i32_5 : i32
    %14 = arith.extui %13 : i1 to i32
    %c0_i32_6 = arith.constant 0 : i32
    %15 = arith.cmpi ne, %14, %c0_i32_6 : i32
    scf.if %15 {
      %c0 = arith.constant 0 : index
      %c0_7 = arith.constant 0 : index
      %16 = vector.load %arg5[%c0, %c0_7] : memref<8x128xf32, #tpu.memory_space<vmem>>, vector<8x128xf32>
      %cst = arith.constant dense<0.000000e+00> : vector<128xf32>
      %17 = vector.multi_reduction <add>, %16, %cst [0] : vector<8x128xf32> to vector<128xf32>
      %18 = vector.shape_cast %17 : vector<128xf32> to vector<1x128xf32>
      %c0_8 = arith.constant 0 : index
      %c0_9 = arith.constant 0 : index
      %19 = vector.load %arg4[%c0_8, %c0_9] : memref<1x128xf32, #tpu.memory_space<vmem>>, vector<1x128xf32>
      tpu.vector_store %arg4[%c0_8, %c0_9], %18 {strides = array<i32>} : memref<1x128xf32, #tpu.memory_space<vmem>>, vector<1x128xf32>,
    } else {
    }
    return
  }
  func.func @transform_0(%arg0: i32, %arg1: i32) -> (i32, i32) {
    %c1_i32 = arith.constant 1 : i32
    %0 = arith.muli %arg0, %c1_i32 : i32
    %1 = arith.addi %0, %arg1 : i32
    %c0_i32 = arith.constant 0 : i32
    %2 = arith.minsi %1, %c0_i32 : i32
    %c0_i32_0 = arith.constant 0 : i32
    %c0_i32_1 = arith.constant 0 : i32
    return %2, %c0_i32_0 : i32, i32
  }
  func.func @transform_1(%arg0: i32, %arg1: i32) -> (i32, i32) {
    %c1_i32 = arith.constant 1 : i32
    %0 = arith.muli %arg0, %c1_i32 : i32
    %1 = arith.addi %0, %arg1 : i32
    %c0_i32 = arith.constant 0 : i32
    %2 = arith.minsi %1, %c0_i32 : i32
    %c0_i32_0 = arith.constant 0 : i32
    %c0_i32_1 = arith.constant 0 : i32
    return %2, %c0_i32_0 : i32, i32
  }
  func.func @transform_2(%arg0: i32, %arg1: i32) -> (i32, i32) {
    %c0_i32 = arith.constant 0 : i32
    %c0_i32_0 = arith.constant 0 : i32
    return %arg0, %c0_i32 : i32, i32
  }
}

</mosaic_0001>

<llo_original>
// kernel: tpu_custom_call.1
$region0: #{tpu_custom_call.1}
  #allocation0 [shape = 'u32[]', space=smem, size = 0x4, offset = 0x4, fixed_abs, tag = 'smem constant byte address 0x4 - core index']
  #allocation1 [shape = 'u32[144,128]{1,0:T(1,128)}', space=vmem, size = 0x12000, scoped, tag = 'internal scratch']
  #allocation2 [shape = 'f32[8,128]{1,0:T(8,128)}', space=vmem, size = 0x1000, scoped, tag = 'scratch operand']
  %s0 = inlined_call_operand.hbm [shape: f32[16,128], index: 0, kind: input, shape index: {}]
  %s1 = inlined_call_operand.hbm [shape: f32[16,128], index: 1, kind: input, shape index: {}]
  %s2 = inlined_call_operand.hbm [shape: f32[1,128], index: 2, kind: output, shape index: {}]
  %s3 = sld [smem:[#allocation0]]
  $region42: #{tpu_custom_call.1} parent=0
    _
  %s5 = ssub.s32 1, %s3
  %s6 = scalar_select 0, %s5, %s3
  $region1: #{tpu_custom_call.1} parent=0
    #allocation3 [shape = 'u8[8192]{0}', space=vmem, size = 0x2000, scoped, tag = 'input window, operand 0, single buffered']
    #allocation4 [shape = 's32[1]{0}', space=sflag, size = 0x4, scoped, tag = 'scoped memory for tpu_custom_call.1']
    #allocation5 [shape = 's32[1]{0}', space=sflag, size = 0x4, scoped, tag = 'scoped memory for tpu_custom_call.1']
    #allocation6 [shape = 'u8[8192]{0}', space=vmem, size = 0x2000, scoped, tag = 'input window, operand 1, single buffered']
    #allocation7 [shape = 's32[1]{0}', space=sflag, size = 0x4, scoped, tag = 'scoped memory for tpu_custom_call.1']
    #allocation8 [shape = 'u8[512]{0}', space=vmem, size = 0x400, scoped, tag = 'output window, operand 0, single buffered']
    %7 = vsyncpa [#allocation4], 0
    %8 = vsyncpa [#allocation7], 0
    %9 = vsyncpa [#allocation5], 0
    // Predicated region
    $region2: #{tpu_custom_call.1} parent=1 // pred_check
      _
    $region3: #{tpu_custom_call.1} parent=1 // pred_check_branch
      %11 = sbr.rel (0) target = $region5
    $region4: #{tpu_custom_call.1} parent=1 // pred_region
      %s12 = sadd.s32 0, 0
      %p13 = scmp.lt.s32.totalorder %s12, 0
      %s14 = scalar_select %p13, %s12, 0
      %s15 = smul.u32 2, %s14
      %s17 = ssub.s32 256, 256
      %18 = vsyncadd [#allocation4], %s17
      %s19 = smul.addr %s15, 128
      %s20 = scalar_lea.hbm %s0, %s19
      %s21 = sshll.u32 [#allocation3], 4
      %s22 = int_to_ptr.vmem [resolvable:$true] %s21
      %27 = dma.hbm_to_vmem [thread:$0]  %s20, 256, %s22, [#allocation4], 128, 128, 8
    $region5: #{tpu_custom_call.1} parent=1 // pred_fallthru
      _
    // Predicated region
    $region6: #{tpu_custom_call.1} parent=1 // pred_check
      _
    $region7: #{tpu_custom_call.1} parent=1 // pred_check_branch
      %29 = sbr.rel (0) target = $region9
    $region8: #{tpu_custom_call.1} parent=1 // pred_region
      %s30 = sadd.s32 0, 0
      %p31 = scmp.lt.s32.totalorder %s30, 0
      %s32 = scalar_select %p31, %s30, 0
      %s33 = smul.u32 2, %s32
      %s35 = ssub.s32 256, 256
      %36 = vsyncadd [#allocation7], %s35
      %s37 = smul.addr %s33, 128
      %s38 = scalar_lea.hbm %s1, %s37
      %s39 = sshll.u32 [#allocation6], 4
      %s40 = int_to_ptr.vmem [resolvable:$true] %s39
      %45 = dma.hbm_to_vmem [thread:$0]  %s38, 256, %s40, [#allocation7], 128, 128, 8
    $region9: #{tpu_custom_call.1} parent=1 // pred_fallthru
      _
    // Predicated region
    $region10: #{tpu_custom_call.1} parent=1 // pred_check
      _
    $region11: #{tpu_custom_call.1} parent=1 // pred_check_branch
      %47 = sbr.rel (0) target = $region13
    $region12: #{tpu_custom_call.1} parent=1 // pred_region
      %48 = dma.done [#allocation4], 256
    $region13: #{tpu_custom_call.1} parent=1 // pred_fallthru
      _
    // Predicated region
    $region14: #{tpu_custom_call.1} parent=1 // pred_check
      _
    $region15: #{tpu_custom_call.1} parent=1 // pred_check_branch
      %50 = sbr.rel (0) target = $region17
    $region16: #{tpu_custom_call.1} parent=1 // pred_region
      %51 = dma.done [#allocation7], 256
    $region17: #{tpu_custom_call.1} parent=1 // pred_fallthru
      _
    %s52 = sadd.s32 0, 0
    %p53 = scmp.lt.s32.totalorder %s52, 0
    %s54 = scalar_select %p53, %s52, 0
    %s55 = smul.u32 2, %s54
    %s56 = sadd.s32 0, 0
    %p57 = scmp.lt.s32.totalorder %s56, 0
    %s58 = scalar_select %p57, %s56, 0
    %s59 = smul.u32 2, %s58
    %p60 = scmp.eq.s32.totalorder 0, 0
    // Predicated region
    $region18: #{tpu_custom_call.1} parent=1 // pred_check
      %p61 = pneg %p60
    $region19: #{tpu_custom_call.1} parent=1 // pred_check_branch
      %63 = sbr.rel (%p61) target = $region21
    $region20: #{tpu_custom_call.1} parent=1 // pred_region
      %64 = vst [vmem:[#allocation2] sm:$0xff] 0.0
    $region21: #{tpu_custom_call.1} parent=1 // pred_fallthru
      _
    %s65 = sadd.s32 0, 0
    %s66 = smul.u32 %s65, 16
    %s67 = sadd.s32 %s66, 16
    %p68 = scmp.gt.s32.totalorder %s67, 16
    %p69 = scmp.le.s32.totalorder %s67, 16
    // Predicated region
    $region22: #{tpu_custom_call.1} parent=1 // pred_check
      %p70 = pneg %p69
    $region23: #{tpu_custom_call.1} parent=1 // pred_check_branch
      %72 = sbr.rel (%p70) target = $region25
    $region24: #{tpu_custom_call.1} parent=1 // pred_region
      %v73 = vld [vmem:[#allocation3] sm:$0xff]
      %v74 = vld [vmem:[#allocation3 + $0x8] sm:$0xff]
      %v75 = vld [vmem:[#allocation6] sm:$0xff]
      %v76 = vld [vmem:[#allocation6 + $0x8] sm:$0xff]
      %v77 = vsub.f32 %v75, %v73
      %v78 = vsub.f32 %v76, %v74
      %v79 = vmul.f32 %v77, %v77
      %v80 = vmul.f32 %v78, %v78
      %v81 = vld [vmem:[#allocation2] sm:$0xff]
      %v82 = vadd.f32 %v79, %v80
      %v83 = vadd.f32 %v81, %v82
      %84 = vst [vmem:[#allocation2] sm:$0xff] %v83
    $region25: #{tpu_custom_call.1} parent=1 // pred_fallthru
      _
    // Predicated region
    $region26: #{tpu_custom_call.1} parent=1 // pred_check
      %p85 = pneg %p68
    $region27: #{tpu_custom_call.1} parent=1 // pred_check_branch
      %87 = sbr.rel (%p85) target = $region29
    $region28: #{tpu_custom_call.1} parent=1 // pred_region
      %v88 = vlaneseq
      %v89 = vshrl.u32 %v88, 7
      %v90 = vadd.s32 %v89, 8
      %v91 = vstv %s66
      %v92 = vadd.s32 %v91, %v89
      %v93 = vadd.s32 %v91, %v90
      %vm94 = vcmp.lt.s32.totalorder %v92, 16
      %vm95 = vcmp.lt.s32.totalorder %v93, 16
      %v96 = vld [vmem:[#allocation3] sm:$0xff]
      %v97 = vld [vmem:[#allocation3 + $0x8] sm:$0xff]
      %v98 = vld [vmem:[#allocation6] sm:$0xff]
      %v99 = vld [vmem:[#allocation6 + $0x8] sm:$0xff]
      %v100 = vsub.f32 %v98, %v96
      %v101 = vsub.f32 %v99, %v97
      %v102 = vsel %vm94, %v100, 0.0
      %v103 = vsel %vm95, %v101, 0.0
      %v104 = vmul.f32 %v102, %v102
      %v105 = vmul.f32 %v103, %v103
      %v106 = vld [vmem:[#allocation2] sm:$0xff]
      %v107 = vadd.f32 %v104, %v105
      %v108 = vadd.f32 %v106, %v107
      %109 = vst [vmem:[#allocation2] sm:$0xff] %v108
    $region29: #{tpu_custom_call.1} parent=1 // pred_fallthru
      _
    // Predicated region
    $region30: #{tpu_custom_call.1} parent=1 // pred_check
      %p110 = pneg %p60
    $region31: #{tpu_custom_call.1} parent=1 // pred_check_branch
      %112 = sbr.rel (%p110) target = $region33
    $region32: #{tpu_custom_call.1} parent=1 // pred_region
      %v113 = vld [vmem:[#allocation2] sm:$0xff]
      %v114 = vrot.slane %v113, 4
      %v115 = vadd.f32 %v113, %v114
      %v116 = vrot.slane %v115, 2
      %v117 = vadd.f32 %v115, %v116
      %v118 = vrot.slane %v117, 1
      %v119 = vadd.f32 %v117, %v118
      %120 = vst [vmem:[#allocation8] sm:$0x1] %v119
    $region33: #{tpu_custom_call.1} parent=1 // pred_fallthru
      _
    // Predicated region
    $region34: #{tpu_custom_call.1} parent=1 // pred_check
      _
    $region35: #{tpu_custom_call.1} parent=1 // pred_check_branch
      %122 = sbr.rel (0) target = $region37
    $region36: #{tpu_custom_call.1} parent=1 // pred_region
      %s124 = ssub.s32 16, 16
      %125 = vsyncadd [#allocation5], %s124
      %s127 = sshll.u32 [#allocation8], 4
      %s128 = int_to_ptr.vmem [resolvable:$true] %s127
      %130 = dma.vmem_to_hbm [thread:$0]  %s128, 16, %s2, [#allocation5]
    $region37: #{tpu_custom_call.1} parent=1 // pred_fallthru
      _
    // Predicated region
    $region38: #{tpu_custom_call.1} parent=1 // pred_check
      _
    $region39: #{tpu_custom_call.1} parent=1 // pred_check_branch
      %132 = sbr.rel (0) target = $region41
    $region40: #{tpu_custom_call.1} parent=1 // pred_region
      %133 = dma.done [#allocation5], 16
    $region41: #{tpu_custom_call.1} parent=1 // pred_fallthru
      _
    %134 = vsyncpa [#allocation4], 1
    %135 = vsyncpa [#allocation7], 1
    %136 = vsyncpa [#allocation5], 1

</llo_original>
